<compile_context>
chip_gen: v6e
topology: v6e:2x2x1
jax: 0.10.0
libtpu: 0.0.40
codegen_flags: <defaults>
</compile_context>

<pallas_src>
import jax
import jax.numpy as jnp
from jax import lax
from jax.experimental import pallas as pl
from jax.experimental.pallas import tpu as pltpu

_MIB = 1024 * 1024


# --------------------------------------------------------------------------------------
# Kernel bodies
# --------------------------------------------------------------------------------------
def _make_kernel(has_bias, split_k):
    """Build the kernel body for the (bias?, K-split?) variant."""

    def _dot(a, b):
        # hidden tile [tm, tk] x weight tile [tv, tk] -> [tm, tv]; contract the last dim
        # of both operands (weight stays in native [V, H] layout), f32 MXU accumulation.
        return lax.dot_general(
            a, b,
            dimension_numbers=(((1,), (1,)), ((), ())),
            preferred_element_type=jnp.float32,
        )

    if not split_k:
        def kernel(dummy_ref, hidden_ref, w_ref, *rest):
            if has_bias:
                bias_ref, out_ref = rest
            else:
                (out_ref,) = rest
            logits = _dot(hidden_ref[...], w_ref[...])
            if has_bias:
                logits = logits + bias_ref[...].astype(jnp.float32)
            # dummy scalar (exactly 0.0, or NaN/Inf if attn/labels contained them) from SMEM.
            out_ref[...] = (logits + dummy_ref[0]).astype(out_ref.dtype)
        return kernel

    def kernel(dummy_ref, hidden_ref, w_ref, *rest):
        if has_bias:
            bias_ref, out_ref, acc_ref = rest
        else:
            out_ref, acc_ref = rest
        k = pl.program_id(2)

        @pl.when(k == 0)
        def _():
            acc_ref[...] = jnp.zeros_like(acc_ref)

        acc_ref[...] += _dot(hidden_ref[...], w_ref[...])

        @pl.when(k == pl.num_programs(2) - 1)
        def _():
            logits = acc_ref[...]
            if has_bias:
                logits = logits + bias_ref[...].astype(jnp.float32)
            out_ref[...] = (logits + dummy_ref[0]).astype(out_ref.dtype)

    return kernel


# --------------------------------------------------------------------------------------
# Tile / VMEM selection
# --------------------------------------------------------------------------------------
def _vmem_capacity_bytes():
    try:
        info = pltpu.get_tpu_info()
        cap = int(getattr(info, "vmem_capacity_bytes", 0) or 0)
        if cap > 0:
            return cap
    except Exception:
        pass
    return 64 * _MIB  # conservative fallback (v7x-sized VMEM)


def _choose_tiles(M, V, H, out_bytes, vmem_budget, has_bias):
    """Pick (tile_m, tile_v, tile_k, split_k) so the double-buffered pipeline fits."""
    # Vocab tile: lane-dense 512 when possible, else the (small) full vocab.
    tile_v = 512 if V >= 512 else V
    # Row tile: large-VMEM parts (v5e/v6e) need ~1024 rows to be MXU-bound; 512 clears
    # the v7x roofline and fits its 64 MiB VMEM.  Both are 16-aligned (bf16 packing)
    # and multiples of the 256-wide MXU.
    req_m = 1024 if vmem_budget >= 72 * _MIB else 512
    tile_m = req_m if M >= req_m else M

    def usage(tm, tv, tk, split):
        u = 2 * (tm * tk * 2)            # hidden blocks, bf16, double-buffered
        u += 2 * (tv * tk * 2)           # weight blocks, bf16, double-buffered
        u += 2 * (tm * tv * out_bytes)   # output blocks, double-buffered
        if has_bias:
            u += 2 * (tv * 4)
        if split:
            u += tm * tv * 4             # f32 accumulator scratch
        return u

    if usage(tile_m, tile_v, H, False) <= vmem_budget:
        return tile_m, tile_v, H, False

    # Un-split H does not fit: try splitting the contraction dim.  Only 128-aligned
    # exact divisors of H are safe (a ragged K block would accumulate garbage).
    k_candidates = [k for k in range(128, H, 128) if H % k == 0]
    for tk in sorted(k_candidates, reverse=True):
        if usage(tile_m, tile_v, tk, True) <= vmem_budget:
            return tile_m, tile_v, tk, True

    # Still too big (or H has no 128-aligned divisor): shrink tile_m, then tile_v.
    tk_min = min(k_candidates) if k_candidates else H
    split = bool(k_candidates)
    tm, tv = tile_m, tile_v
    while tm > 256 and usage(tm, tv, tk_min, split) > vmem_budget:
        tm -= 256
    while tv > 128 and usage(tm, tv, tk_min, split) > vmem_budget:
        tv -= 128
    return tm, tv, tk_min, split


# --------------------------------------------------------------------------------------
# Public wrapper
# --------------------------------------------------------------------------------------
def lm_head_pipe(hidden, attn, labels_f, weight, bias=None, *, out_dtype=jnp.float32):
    """Pallas implementation of LMHeadPipe.forward.

    hidden:   [B, S, H]
    attn:     [B, S]     attention mask  (only feeds the *0.0 dummy scalar)
    labels_f: [B, S]     float labels    (only feeds the *0.0 dummy scalar)
    weight:   [V, H]     nn.Linear weight, native PyTorch layout.  Pre-cast to bfloat16
                         once at parameter load to avoid re-converting [V, H] every call.
    bias:     [V] | None nn.Linear bias (LM heads are typically bias=False).
    returns:  [B, S, V]  out_dtype (float32 matches the PyTorch forward).
    """
    B, S, H = hidden.shape
    V, H_w = weight.shape
    assert H_w == H, f"weight is {weight.shape}, expected [V, {H}]"
    if bias is not None:
        assert bias.shape == (V,), f"bias is {bias.shape}, expected ({V},)"
    M = B * S

    # dummy = (attn.float().sum() + labels_f.sum()) * 0.0 : a single scalar, computed
    # once in plain JAX (preserves NaN/Inf propagation) and fed to the kernel via SMEM
    # so no per-grid-step cross-lane reduction is needed.
    dummy = ((attn.astype(jnp.float32).sum() + labels_f.sum()) * 0.0).reshape(1)
    dummy = dummy.astype(jnp.float32)

    # bf16 operands for the MXU; accumulation stays f32 inside the kernel.
    hidden2d = hidden.reshape(M, H).astype(jnp.bfloat16)
    if weight.dtype != jnp.bfloat16:
        # Fallback only — callers should cast once at parameter load (see __main__).
        weight = weight.astype(jnp.bfloat16)

    out_bytes = jnp.dtype(out_dtype).itemsize
    vmem_cap = _vmem_capacity_bytes()
    vmem_limit = min(int(0.75 * vmem_cap), vmem_cap - 8 * _MIB)
    vmem_budget = vmem_limit - 4 * _MIB  # headroom for compiler scratch / semaphores
    has_bias = bias is not None

    tile_m, tile_v, tile_k, split_k = _choose_tiles(
        M, V, H, out_bytes, vmem_budget, has_bias)

    grid_m = pl.cdiv(M, tile_m)
    grid_v = pl.cdiv(V, tile_v)

    in_specs = [
        # Scalar dummy lives whole in SMEM — no per-step DMA stream.
        pl.BlockSpec(memory_space=pltpu.MemorySpace.SMEM),
    ]
    args = [dummy, hidden2d, weight]

    if not split_k:
        grid = (grid_m, grid_v)
        in_specs += [
            pl.BlockSpec((tile_m, H), lambda i, j: (i, 0)),   # hidden rows, full H
            pl.BlockSpec((tile_v, H), lambda i, j: (j, 0)),   # weight rows, native [V, H]
        ]
        if has_bias:
            in_specs.append(pl.BlockSpec((1, tile_v), lambda i, j: (0, j)))
        out_specs = pl.BlockSpec((tile_m, tile_v), lambda i, j: (i, j))
        scratch_shapes = ()
        dim_sem = ("parallel", "parallel")
    else:
        grid = (grid_m, grid_v, H // tile_k)
        in_specs += [
            pl.BlockSpec((tile_m, tile_k), lambda i, j, k: (i, k)),
            pl.BlockSpec((tile_v, tile_k), lambda i, j, k: (j, k)),
        ]
        if has_bias:
            in_specs.append(pl.BlockSpec((1, tile_v), lambda i, j, k: (0, j)))
        out_specs = pl.BlockSpec((tile_m, tile_v), lambda i, j, k: (i, j))
        scratch_shapes = (pltpu.VMEM((tile_m, tile_v), jnp.float32),)
        dim_sem = ("parallel", "parallel", "arbitrary")

    if has_bias:
        args.append(bias.astype(jnp.float32).reshape(1, V))

    kernel = _make_kernel(has_bias, split_k)

    # Advisory cost estimate so XLA schedules surrounding ops around this long call.
    bytes_accessed = (
        M * H * 2                # hidden stream (bf16)
        + grid_m * V * H * 2     # weight re-streamed once per row-tile
        + M * V * out_bytes      # logits writeback
    )
    cost = pl.CostEstimate(flops=2 * M * V * H, transcendentals=0,
                           bytes_accessed=bytes_accessed)

    out2d = pl.pallas_call(
        kernel,
        out_shape=jax.ShapeDtypeStruct((M, V), out_dtype),
        grid=grid,
        in_specs=in_specs,
        out_specs=out_specs,
        scratch_shapes=scratch_shapes,
        compiler_params=pltpu.CompilerParams(
            dimension_semantics=dim_sem,
            vmem_limit_bytes=vmem_limit,
        ),
        cost_estimate=cost,
    )(*args)

    return out2d.reshape(B, S, V)


# --------------------------------------------------------------------------------------
# Demo / self-check
# --------------------------------------------------------------------------------------
if __name__ == "__main__":
    # Small deterministic shapes: batch=2, seq=8, hidden=32, vocab=256
    B, S, H, V = 2, 8, 32, 256
    key = jax.random.PRNGKey(0)
    k_h, k_w, k_l = jax.random.split(key, 3)

    hidden = jax.random.normal(k_h, (B, S, H), dtype=jnp.float32)
    attn = jnp.ones((B, S), dtype=jnp.int32)
    labels_f = jax.random.normal(k_l, (B, S), dtype=jnp.float32)

    # lm_head weight in PyTorch layout [V, H]; cast to bf16 ONCE here (stands in for
    # "cast at parameter load"), so the per-call path never re-converts the full matrix.
    weight_f32 = jax.random.normal(k_w, (V, H), dtype=jnp.float32) * 0.02
    weight_bf16 = weight_f32.astype(jnp.bfloat16)

    logits = lm_head_pipe(hidden, attn, labels_f, weight_bf16)
    jax.block_until_ready(logits)

    # Sanity check vs. a plain-JAX reference (bf16 operands => loosened tolerance).
    ref = jnp.einsum(
        "bsh,vh->bsv",
        hidden.astype(jnp.bfloat16).astype(jnp.float32),
        weight_bf16.astype(jnp.float32),
    )
    ref = ref + (attn.astype(jnp.float32).sum() + labels_f.sum()) * 0.0

    assert logits.shape == (B, S, V)
    assert logits.dtype == jnp.float32
    assert jnp.allclose(logits, ref, atol=1e-2, rtol=1e-2)

    print("KERNEL_OK")
</pallas_src>

<mosaic_0001>
module attributes {stable_mosaic.version = 11 : i64} {
  func.func @kernel(%arg0: i32, %arg1: i32, %arg2: memref<1xf32, #tpu.memory_space<smem>>, %arg3: memref<16x32xbf16, #tpu.memory_space<vmem>>, %arg4: memref<256x32xbf16, #tpu.memory_space<vmem>>, %arg5: memref<16x256xf32, #tpu.memory_space<vmem>>) attributes {dimension_semantics = [#tpu.dimension_semantics<parallel>, #tpu.dimension_semantics<parallel>], iteration_bounds = array<i64: 1, 1>, scalar_prefetch = 0 : i64, scratch_operands = 0 : i64, tpu.core_type = #tpu.core_type<tc>, window_params = [{transform_indices = @transform_0, window_bounds = array<i64: 1>}, {transform_indices = @transform_1, window_bounds = array<i64: 16, 32>}, {transform_indices = @transform_2, window_bounds = array<i64: 256, 32>}, {transform_indices = @transform_3, window_bounds = array<i64: 16, 256>}]} {
    %c0 = arith.constant 0 : index
    %c0_0 = arith.constant 0 : index
    %0 = vector.load %arg3[%c0, %c0_0] : memref<16x32xbf16, #tpu.memory_space<vmem>>, vector<16x32xbf16>
    %c0_1 = arith.constant 0 : index
    %c0_2 = arith.constant 0 : index
    %1 = vector.load %arg4[%c0_1, %c0_2] : memref<256x32xbf16, #tpu.memory_space<vmem>>, vector<256x32xbf16>
    %cst = arith.constant dense<0.000000e+00> : vector<16x256xf32>
    %2 = tpu.matmul %0, %1, %cst {dimension_numbers = #tpu.dot_dimension_numbers<[1], [1], [0], [0], [0, 0, 1, 0], [], []>} : vector<16x32xbf16>, vector<256x32xbf16>, vector<16x256xf32> -> vector<16x256xf32>
    %c0_3 = arith.constant 0 : index
    %3 = memref.load %arg2[%c0_3] : memref<1xf32, #tpu.memory_space<smem>>
    %4 = vector.broadcast %3 : f32 to vector<16x256xf32>
    %5 = arith.addf %2, %4 : vector<16x256xf32>
    %c0_4 = arith.constant 0 : index
    %c0_5 = arith.constant 0 : index
    %6 = vector.load %arg5[%c0_4, %c0_5] : memref<16x256xf32, #tpu.memory_space<vmem>>, vector<16x256xf32>
    tpu.vector_store %arg5[%c0_4, %c0_5], %5 {strides = array<i32>} : memref<16x256xf32, #tpu.memory_space<vmem>>, vector<16x256xf32>,
    return
  }
  func.func @transform_0(%arg0: i32, %arg1: i32) -> i32 {
    %c0_i32 = arith.constant 0 : i32
    %c0_i32_0 = arith.constant 0 : i32
    return %c0_i32 : i32
  }
  func.func @transform_1(%arg0: i32, %arg1: i32) -> (i32, i32) {
    %c0_i32 = arith.constant 0 : i32
    %c0_i32_0 = arith.constant 0 : i32
    return %arg0, %c0_i32 : i32, i32
  }
  func.func @transform_2(%arg0: i32, %arg1: i32) -> (i32, i32) {
    %c0_i32 = arith.constant 0 : i32
    %c0_i32_0 = arith.constant 0 : i32
    return %arg1, %c0_i32 : i32, i32
  }
  func.func @transform_3(%arg0: i32, %arg1: i32) -> (i32, i32) {
    %c0_i32 = arith.constant 0 : i32
    return %arg0, %arg1 : i32, i32
  }
}

</mosaic_0001>

<llo_original>
// kernel: tpu_custom_call.1
$region0: #{tpu_custom_call.1}
  #allocation0 [shape = 'u32[]', space=smem, size = 0x4, offset = 0x4, fixed_abs, tag = 'smem constant byte address 0x4 - core index']
  #allocation1 [shape = 'u32[144,128]{1,0:T(1,128)}', space=vmem, size = 0x12000, scoped, tag = 'internal scratch']
  #allocation2 [shape = 'f32[1]{0:T(128)S(6)}', space=smem, size = 0x200, scoped, tag = 'scoped memory for tpu_custom_call.1']
  %s0 = inlined_call_operand.<no memory space> [shape: f32[1], index: 0, kind: input, shape index: {}]
  %s1 = inlined_call_operand.vmem [shape: bf16[16,32], index: 1, kind: input, shape index: {}]
  %s2 = inlined_call_operand.vmem [shape: bf16[256,32], index: 2, kind: input, shape index: {}]
  %s3 = inlined_call_operand.hbm [shape: f32[16,256], index: 3, kind: output, shape index: {}]
  %s4 = sld [smem:[#allocation0]]
  $region22: #{tpu_custom_call.1} parent=0
    _
  %s6 = ssub.s32 1, %s4
  %s7 = scalar_select 0, %s6, %s4
  %8 = sst [smem:[#allocation2]] %s0
  $region1: #{tpu_custom_call.1} parent=0
    #allocation3 [shape = 'u8[16384]{0}', space=vmem, size = 0x4000, scoped, tag = 'output window, operand 0, single buffered']
    #allocation4 [shape = 's32[1]{0}', space=sflag, size = 0x4, scoped, tag = 'scoped memory for tpu_custom_call.1']
    %9 = vsyncpa [#allocation4], 0
    // Predicated region
    $region2: #{tpu_custom_call.1} parent=1 // pred_check
      _
    $region3: #{tpu_custom_call.1} parent=1 // pred_check_branch
      %11 = sbr.rel (0) target = $region5
    $region4: #{tpu_custom_call.1} parent=1 // pred_region
      _
    $region5: #{tpu_custom_call.1} parent=1 // pred_fallthru
      _
    // Predicated region
    $region6: #{tpu_custom_call.1} parent=1 // pred_check
      _
    $region7: #{tpu_custom_call.1} parent=1 // pred_check_branch
      %13 = sbr.rel (0) target = $region9
    $region8: #{tpu_custom_call.1} parent=1 // pred_region
      _
    $region9: #{tpu_custom_call.1} parent=1 // pred_fallthru
      _
    // Predicated region
    $region10: #{tpu_custom_call.1} parent=1 // pred_check
      _
    $region11: #{tpu_custom_call.1} parent=1 // pred_check_branch
      %15 = sbr.rel (0) target = $region13
    $region12: #{tpu_custom_call.1} parent=1 // pred_region
      _
    $region13: #{tpu_custom_call.1} parent=1 // pred_fallthru
      _
    %v17 = vld [vmem:[%s1] sm:$0xf]
    %v18 = vld [vmem:[%s1 + $0x4] sm:$0xf]
    %v19 = vld [vmem:[%s2] sm:$0xf]
    %v20 = vld [vmem:[%s2 + $0x4] sm:$0xf]
    %v21 = vld [vmem:[%s2 + $0x8] sm:$0xf]
    %v22 = vld [vmem:[%s2 + $0xc] sm:$0xf]
    %v23 = vld [vmem:[%s2 + $0x10] sm:$0xf]
    %v24 = vld [vmem:[%s2 + $0x14] sm:$0xf]
    %v25 = vld [vmem:[%s2 + $0x18] sm:$0xf]
    %v26 = vld [vmem:[%s2 + $0x1c] sm:$0xf]
    %v27 = vld [vmem:[%s2 + $0x20] sm:$0xf]
    %v28 = vld [vmem:[%s2 + $0x24] sm:$0xf]
    %v29 = vld [vmem:[%s2 + $0x28] sm:$0xf]
    %v30 = vld [vmem:[%s2 + $0x2c] sm:$0xf]
    %v31 = vld [vmem:[%s2 + $0x30] sm:$0xf]
    %v32 = vld [vmem:[%s2 + $0x34] sm:$0xf]
    %v33 = vld [vmem:[%s2 + $0x38] sm:$0xf]
    %v34 = vld [vmem:[%s2 + $0x3c] sm:$0xf]
    %v35 = vld [vmem:[%s2 + $0x40] sm:$0xf]
    %v36 = vld [vmem:[%s2 + $0x44] sm:$0xf]
    %v37 = vld [vmem:[%s2 + $0x48] sm:$0xf]
    %v38 = vld [vmem:[%s2 + $0x4c] sm:$0xf]
    %v39 = vld [vmem:[%s2 + $0x50] sm:$0xf]
    %v40 = vld [vmem:[%s2 + $0x54] sm:$0xf]
    %v41 = vld [vmem:[%s2 + $0x58] sm:$0xf]
    %v42 = vld [vmem:[%s2 + $0x5c] sm:$0xf]
    %v43 = vld [vmem:[%s2 + $0x60] sm:$0xf]
    %v44 = vld [vmem:[%s2 + $0x64] sm:$0xf]
    %v45 = vld [vmem:[%s2 + $0x68] sm:$0xf]
    %v46 = vld [vmem:[%s2 + $0x6c] sm:$0xf]
    %v47 = vld [vmem:[%s2 + $0x70] sm:$0xf]
    %v48 = vld [vmem:[%s2 + $0x74] sm:$0xf]
    %v49 = vld [vmem:[%s2 + $0x78] sm:$0xf]
    %v50 = vld [vmem:[%s2 + $0x7c] sm:$0xf]
    %s51 = sld [smem:[#allocation2]]
    %v52 = vstv %s51
    %v55 = vunpack.c.l.b16 %v17
    %v56 = vunpack.c.l.b16 %v18
    %v57 = vpack.c.b16 %v56, %v55
    %v90 = vunpack.c.l.b16 %v19
    %v91 = vunpack.c.l.b16 %v20
    %v92 = vunpack.c.l.b16 %v21
    %v93 = vunpack.c.l.b16 %v22
    %v94 = vunpack.c.l.b16 %v23
    %v95 = vunpack.c.l.b16 %v24
    %v96 = vunpack.c.l.b16 %v25
    %v97 = vunpack.c.l.b16 %v26
    %v98 = vunpack.c.l.b16 %v27
    %v99 = vunpack.c.l.b16 %v28
    %v100 = vunpack.c.l.b16 %v29
    %v101 = vunpack.c.l.b16 %v30
    %v102 = vunpack.c.l.b16 %v31
    %v103 = vunpack.c.l.b16 %v32
    %v104 = vunpack.c.l.b16 %v33
    %v105 = vunpack.c.l.b16 %v34
    %v106 = vunpack.c.l.b16 %v35
    %v107 = vunpack.c.l.b16 %v36
    %v108 = vunpack.c.l.b16 %v37
    %v109 = vunpack.c.l.b16 %v38
    %v110 = vunpack.c.l.b16 %v39
    %v111 = vunpack.c.l.b16 %v40
    %v112 = vunpack.c.l.b16 %v41
    %v113 = vunpack.c.l.b16 %v42
    %v114 = vunpack.c.l.b16 %v43
    %v115 = vunpack.c.l.b16 %v44
    %v116 = vunpack.c.l.b16 %v45
    %v117 = vunpack.c.l.b16 %v46
    %v118 = vunpack.c.l.b16 %v47
    %v119 = vunpack.c.l.b16 %v48
    %v120 = vunpack.c.l.b16 %v49
    %v121 = vunpack.c.l.b16 %v50
    %v122 = vpack.c.b16 %v91, %v90
    %v123 = vpack.c.b16 %v93, %v92
    %v124 = vpack.c.b16 %v95, %v94
    %v125 = vpack.c.b16 %v97, %v96
    %v126 = vpack.c.b16 %v99, %v98
    %v127 = vpack.c.b16 %v101, %v100
    %v128 = vpack.c.b16 %v103, %v102
    %v129 = vpack.c.b16 %v105, %v104
    %v130 = vpack.c.b16 %v107, %v106
    %v131 = vpack.c.b16 %v109, %v108
    %v132 = vpack.c.b16 %v111, %v110
    %v133 = vpack.c.b16 %v113, %v112
    %v134 = vpack.c.b16 %v115, %v114
    %v135 = vpack.c.b16 %v117, %v116
    %v136 = vpack.c.b16 %v119, %v118
    %v137 = vpack.c.b16 %v121, %v120
    %vm138 = vcmask 261120
    %v140 = vsel %vm138, %v57, 0
    %v143 = vsel %vm138, %v122, 0
    %v146 = vsel %vm138, %v123, 0
    %v149 = vsel %vm138, %v124, 0
    %v152 = vsel %vm138, %v125, 0
    %v155 = vsel %vm138, %v126, 0
    %v158 = vsel %vm138, %v127, 0
    %v161 = vsel %vm138, %v128, 0
    %v164 = vsel %vm138, %v129, 0
    %v167 = vsel %vm138, %v130, 0
    %v170 = vsel %vm138, %v131, 0
    %v173 = vsel %vm138, %v132, 0
    %v176 = vsel %vm138, %v133, 0
    %v179 = vsel %vm138, %v134, 0
    %v182 = vsel %vm138, %v135, 0
    %v185 = vsel %vm138, %v136, 0
    %v188 = vsel %vm138, %v137, 0
    %190 = vmatprep.subr.bf16.mxu0 0
    %191 = vmatpush1.bf16.xpose.msra.mxu0 %v164
    %192 = vmatprep.subr.bf16.mxu0 0
    %193 = vmatpush1.bf16.xpose.msra.mxu0 %v161
    %194 = vmatprep.subr.bf16.mxu0 0
    %195 = vmatpush1.bf16.xpose.msra.mxu0 %v158
    %196 = vmatprep.subr.bf16.mxu0 0
    %197 = vmatpush1.bf16.xpose.msra.mxu0 %v155
    %198 = vmatprep.subr.bf16.mxu0 0
    %199 = vmatpush1.bf16.xpose.msra.mxu0 %v152
    %200 = vmatprep.subr.bf16.mxu0 0
    %201 = vmatpush1.bf16.xpose.msra.mxu0 %v149
    %202 = vmatprep.subr.bf16.mxu0 0
    %203 = vmatpush1.bf16.xpose.msra.mxu0 %v146
    %204 = vmatprep.subr.bf16.mxu0 0
    %205 = vmatpush1.bf16.xpose.msra.mxu0 %v143
    %206 = vmatprep.subr.bf16.mxu0 0
    %207 = vmatpush2.bf16.xpose.msra.mxu0 %v188
    %208 = vmatprep.subr.bf16.mxu0 0
    %209 = vmatpush2.bf16.xpose.msra.mxu0 %v185
    %210 = vmatprep.subr.bf16.mxu0 0
    %211 = vmatpush2.bf16.xpose.msra.mxu0 %v182
    %212 = vmatprep.subr.bf16.mxu0 0
    %213 = vmatpush2.bf16.xpose.msra.mxu0 %v179
    %214 = vmatprep.subr.bf16.mxu0 0
    %215 = vmatpush2.bf16.xpose.msra.mxu0 %v176
    %216 = vmatprep.subr.bf16.mxu0 0
    %217 = vmatpush2.bf16.xpose.msra.mxu0 %v173
    %218 = vmatprep.subr.bf16.mxu0 0
    %219 = vmatpush2.bf16.xpose.msra.mxu0 %v170
    %220 = vmatprep.subr.bf16.mxu0 0
    %221 = vmatpush2.bf16.xpose.msra.mxu0 %v167
    %222 = vmatprep.mubr.bf16.mxu0 0
    %223 = vmatmul.mubr.bf16.gmra.mxu0 %v140
    %v224 = vpop.f32.mrf.mxu0
    %v225 = vadd.f32 %v52, %v224
    %v226 = vpop.f32.mrf.mxu0
    %v227 = vadd.f32 %v52, %v226
    %v228 = vpop.f32.mrf.mxu0
    %v229 = vadd.f32 %v52, %v228
    %v230 = vpop.f32.mrf.mxu0
    %v231 = vadd.f32 %v52, %v230
    %232 = vdwg.mxu0
    %233 = vst [vmem:[#allocation3] sm:$0xff] %v225
    %234 = vst [vmem:[#allocation3 + $0x8] sm:$0xff] %v227
    %235 = vst [vmem:[#allocation3 + $0x10] sm:$0xff] %v229
    %236 = vst [vmem:[#allocation3 + $0x18] sm:$0xff] %v231
    // Predicated region
    $region14: #{tpu_custom_call.1} parent=1 // pred_check
      _
    $region15: #{tpu_custom_call.1} parent=1 // pred_check_branch
      %238 = sbr.rel (0) target = $region17
    $region16: #{tpu_custom_call.1} parent=1 // pred_region
      %s240 = ssub.s32 512, 512
      %241 = vsyncadd [#allocation4], %s240
      %s242 = sshll.u32 [#allocation3], 4
      %s243 = int_to_ptr.vmem [resolvable:$true] %s242
      %248 = dma.vmem_to_hbm [thread:$0]  %s243, 512, %s3, [#allocation4], 256, 256, 16
    $region17: #{tpu_custom_call.1} parent=1 // pred_fallthru
      _
    // Predicated region
    $region18: #{tpu_custom_call.1} parent=1 // pred_check
      _
    $region19: #{tpu_custom_call.1} parent=1 // pred_check_branch
      %250 = sbr.rel (0) target = $region21
    $region20: #{tpu_custom_call.1} parent=1 // pred_region
      %251 = dma.done [#allocation4], 512
    $region21: #{tpu_custom_call.1} parent=1 // pred_fallthru
      _
    %252 = vsyncpa [#allocation4], 1

</llo_original>
